<compile_context>
chip_gen: v7x
topology: tpu7x:2x2x1
jax: 0.10.0
libtpu: 0.0.40
codegen_flags: <defaults>
</compile_context>

<pallas_src>
import functools

import jax
import jax.numpy as jnp
from jax.experimental import pallas as pl
from jax.experimental.pallas import tpu as pltpu


def _round_up(x, m):
    return (x + m - 1) // m * m


def _pad2(x, rows, cols):
    r, c = x.shape
    return jnp.pad(x, ((0, rows - r), (0, cols - c)))


_BATCH_TILE_CAP = 512  # rows per grid step (always a multiple of 8)


def _batch_tiling(B):
    """Pick (batch_tile, grid_size).

    * B <= cap : one (possibly ragged) block covering the whole batch.
    * B  > cap : >= 2 grid steps (v7x megacore) with the tile sized so the
      ragged tail wastes at most ~8 rows of compute.
    """
    if B <= _BATCH_TILE_CAP:
        tb = _round_up(B, 8)
    else:
        n_steps = max(2, pl.cdiv(B, _BATCH_TILE_CAP))
        tb = _round_up(pl.cdiv(B, n_steps), 8)
    return tb, pl.cdiv(B, tb)


# -----------------------------------------------------------------------------
# Kernels
# -----------------------------------------------------------------------------
def _fused_msg_enc_kernel(scale_ref, d_ref, pre_ref, cur_ref,
                          mw1_ref, mb1_ref, mw2_ref, mb2_ref,
                          ew1_ref, eb1_ref, ew2_ref, eb2_ref,
                          o_ref, cat0, cat1):
    """out = enc(cat(pre, msg(cat(cur, d)))) * scale, fully fused in VMEM."""
    D = d_ref.shape[1]            # true feature width (e.g. 100)
    DP = cat0.shape[1] // 2       # lane-padded feature width (e.g. 128)
    bf = cat0.dtype               # bf16 MXU input dtype

    # One-time zeroing of the persistent concat scratch (pad lanes must be 0).
    @pl.when(pl.program_id(0) == 0)
    def _():
        cat0[...] = jnp.zeros_like(cat0)
        cat1[...] = jnp.zeros_like(cat1)

    # Pre-stage the enc-stage `pre` half before the msg dots (no dependence on
    # msg, so the cast+store hides under the MXU work below).
    cat1[:, :D] = pre_ref[...].astype(bf)

    # --- msg = ReLU([cur | d] @ W1 + b1) @ W2 + b2   (single K=2*DP dot) ---
    cat0[:, :D] = cur_ref[...].astype(bf)
    cat0[:, DP:DP + D] = d_ref[...].astype(bf)
    h = jnp.dot(cat0[...], mw1_ref[...], preferred_element_type=jnp.float32)
    h = jnp.maximum(h + mb1_ref[...], 0.0)
    msg = jnp.dot(h.astype(bf), mw2_ref[...],
                  preferred_element_type=jnp.float32) + mb2_ref[...]

    # --- out = (ReLU([pre | msg] @ W1 + b1) @ W2 + b2) * w ---
    # msg's pad columns are exactly zero (W2/b2 pad columns are zero), so a
    # full-width aligned store keeps cat1's pad lanes clean.
    cat1[:, DP:] = msg.astype(bf)
    h2 = jnp.dot(cat1[...], ew1_ref[...], preferred_element_type=jnp.float32)
    h2 = jnp.maximum(h2 + eb1_ref[...], 0.0)
    out = jnp.dot(h2.astype(bf), ew2_ref[...],
                  preferred_element_type=jnp.float32) + eb2_ref[...]
    o_ref[...] = (out[:, :D] * scale_ref[0]).astype(o_ref.dtype)


def _enc_only_kernel(scale_ref, d_ref, pre_ref,
                     ew1_ref, eb1_ref, ew2_ref, eb2_ref,
                     o_ref, cat0):
    """out = enc(cat(pre_vec, d_vec)) * scale   (cat_msg=False branch)."""
    D = d_ref.shape[1]
    DP = cat0.shape[1] // 2
    bf = cat0.dtype

    @pl.when(pl.program_id(0) == 0)
    def _():
        cat0[...] = jnp.zeros_like(cat0)

    cat0[:, :D] = pre_ref[...].astype(bf)
    cat0[:, DP:DP + D] = d_ref[...].astype(bf)
    h = jnp.dot(cat0[...], ew1_ref[...], preferred_element_type=jnp.float32)
    h = jnp.maximum(h + eb1_ref[...], 0.0)
    out = jnp.dot(h.astype(bf), ew2_ref[...],
                  preferred_element_type=jnp.float32) + eb2_ref[...]
    o_ref[...] = (out[:, :D] * scale_ref[0]).astype(o_ref.dtype)


# -----------------------------------------------------------------------------
# Module
# -----------------------------------------------------------------------------
class AggregateCatEncPallas:
    """JAX/Pallas port of SceneGraphNet.model.AggregateCatEnc."""

    def __init__(self, k=54, d=100, h=300, key=None,
                 weight_dtype=jnp.bfloat16):
        if key is None:
            key = jax.random.PRNGKey(0)
        self.d, self.h = d, h
        self.dp = _round_up(d, 128)   # lane-padded feature dim
        self.hp = _round_up(h, 128)   # lane-padded hidden dim
        keys = jax.random.split(key, 8)
        sc = 0.05  # deterministic small-scale synthetic init

        def make_mlp(kw1, kb1, kw2, kb2):
            w1 = jax.random.normal(kw1, (2 * d, h), jnp.float32) * sc
            b1 = jax.random.normal(kb1, (h,), jnp.float32) * sc
            w2 = jax.random.normal(kw2, (h, d), jnp.float32) * sc
            b2 = jax.random.normal(kb2, (d,), jnp.float32) * sc
            # Split the (2d,h) first-layer weight at the concat boundary, pad
            # each half to (dp,hp) so it matches the in-kernel concat layout,
            # then re-stack into one (2dp,hp) matrix for a single K=2dp dot.
            w1a = _pad2(w1[:d], self.dp, self.hp)
            w1b = _pad2(w1[d:], self.dp, self.hp)
            w1p = jnp.concatenate([w1a, w1b], axis=0).astype(weight_dtype)
            b1p = _pad2(b1.reshape(1, h), 1, self.hp)                 # f32
            w2p = _pad2(w2, self.hp, self.dp).astype(weight_dtype)    # zero pad cols
            b2p = _pad2(b2.reshape(1, d), 1, self.dp)                 # f32
            return w1p, b1p, w2p, b2p

        (self.enc_w1, self.enc_b1,
         self.enc_w2, self.enc_b2) = make_mlp(keys[0], keys[1], keys[2], keys[3])
        (self.msg_w1, self.msg_b1,
         self.msg_w2, self.msg_b2) = make_mlp(keys[4], keys[5], keys[6], keys[7])

    # ---- pallas_call wrappers ------------------------------------------------
    def _fused_call(self, d_vec, pre_vec, cur_vec, w):
        B, d = d_vec.shape
        tb, grid = _batch_tiling(B)
        dp, hp = self.dp, self.hp
        scale = jnp.asarray(w, jnp.float32).reshape(1)

        act_spec = pl.BlockSpec((tb, d), lambda i, s: (i, 0))
        w1_spec = pl.BlockSpec((2 * dp, hp), lambda i, s: (0, 0))
        b1_spec = pl.BlockSpec((1, hp), lambda i, s: (0, 0))
        w2_spec = pl.BlockSpec((hp, dp), lambda i, s: (0, 0))
        b2_spec = pl.BlockSpec((1, dp), lambda i, s: (0, 0))

        grid_spec = pltpu.PrefetchScalarGridSpec(
            num_scalar_prefetch=1,            # `scale` lives in SMEM
            grid=(grid,),
            in_specs=[act_spec, act_spec, act_spec,
                      w1_spec, b1_spec, w2_spec, b2_spec,     # msg MLP
                      w1_spec, b1_spec, w2_spec, b2_spec],    # enc MLP
            out_specs=pl.BlockSpec((tb, d), lambda i, s: (i, 0)),
            scratch_shapes=[pltpu.VMEM((tb, 2 * dp), jnp.bfloat16),   # [cur|d]
                            pltpu.VMEM((tb, 2 * dp), jnp.bfloat16)],  # [pre|msg]
        )
        return pl.pallas_call(
            _fused_msg_enc_kernel,
            grid_spec=grid_spec,
            out_shape=jax.ShapeDtypeStruct((B, d), jnp.float32),
            compiler_params=pltpu.CompilerParams(
                dimension_semantics=("parallel",)),
        )(scale, d_vec, pre_vec, cur_vec,
          self.msg_w1, self.msg_b1, self.msg_w2, self.msg_b2,
          self.enc_w1, self.enc_b1, self.enc_w2, self.enc_b2)

    def _enc_call(self, d_vec, pre_vec, w):
        B, d = d_vec.shape
        tb, grid = _batch_tiling(B)
        dp, hp = self.dp, self.hp
        scale = jnp.asarray(w, jnp.float32).reshape(1)

        act_spec = pl.BlockSpec((tb, d), lambda i, s: (i, 0))
        grid_spec = pltpu.PrefetchScalarGridSpec(
            num_scalar_prefetch=1,
            grid=(grid,),
            in_specs=[act_spec, act_spec,
                      pl.BlockSpec((2 * dp, hp), lambda i, s: (0, 0)),
                      pl.BlockSpec((1, hp), lambda i, s: (0, 0)),
                      pl.BlockSpec((hp, dp), lambda i, s: (0, 0)),
                      pl.BlockSpec((1, dp), lambda i, s: (0, 0))],
            out_specs=pl.BlockSpec((tb, d), lambda i, s: (i, 0)),
            scratch_shapes=[pltpu.VMEM((tb, 2 * dp), jnp.bfloat16)],
        )
        return pl.pallas_call(
            _enc_only_kernel,
            grid_spec=grid_spec,
            out_shape=jax.ShapeDtypeStruct((B, d), jnp.float32),
            compiler_params=pltpu.CompilerParams(
                dimension_semantics=("parallel",)),
        )(scale, d_vec, pre_vec,
          self.enc_w1, self.enc_b1, self.enc_w2, self.enc_b2)

    # ---- public API ----------------------------------------------------------
    @functools.partial(jax.jit, static_argnums=(0, 5))
    def _forward(self, d_vec, pre_vec, cur_d_vec, w, cat_msg):
        if cat_msg:
            # msg = self.msg(cat(cur_d_vec, d_vec)); out = self.enc(cat(pre, msg)) * w
            return self._fused_call(d_vec, pre_vec, cur_d_vec, w)
        # msg = d_vec; out = self.enc(cat(pre_vec, msg)) * w
        return self._enc_call(d_vec, pre_vec, w)

    def __call__(self, d_vec, pre_vec, cur_d_vec, w=1.0, cat_msg=(False,)):
        # Inputs may be f32 (module semantics) or pre-cast bf16 (halves the
        # activation HBM stream; the kernel casts to bf16 either way).
        return self._forward(d_vec, pre_vec, cur_d_vec,
                             jnp.float32(w), bool(cat_msg[0]))

    # Plain-JAX f32 reference (same bf16-quantised, zero-padded weights).
    def reference(self, d_vec, pre_vec, cur_d_vec, w=1.0, cat_msg=(False,)):
        d, dp = self.d, self.dp
        f32 = jnp.float32

        def padcols(x):
            x = x.astype(f32)
            return jnp.pad(x, ((0, 0), (0, dp - x.shape[1])))

        def mlp(a, b, w1, b1, w2, b2):
            x = jnp.concatenate([padcols(a), padcols(b)], axis=1)
            hid = jnp.maximum(x @ w1.astype(f32) + b1, 0.0)
            return (hid @ w2.astype(f32) + b2)[:, :d]

        if cat_msg[0]:
            msg = mlp(cur_d_vec, d_vec, self.msg_w1, self.msg_b1,
                      self.msg_w2, self.msg_b2)
        else:
            msg = d_vec
        out = mlp(pre_vec, msg, self.enc_w1, self.enc_b1,
                  self.enc_w2, self.enc_b2) * w
        return out


if __name__ == "__main__":
    D_IN, H = 100, 300           # original module defaults (padded to 128/384)
    key = jax.random.PRNGKey(0)
    k1, k2, k3, kp, kb = jax.random.split(key, 5)

    model = AggregateCatEncPallas(d=D_IN, h=H, key=kp)

    # --- small batch (B=6, not a multiple of 8 -> masked ragged block) -------
    B = 6
    d_vec = jax.random.normal(k1, (B, D_IN), jnp.float32)
    pre_vec = jax.random.normal(k2, (B, D_IN), jnp.float32)
    cur_d_vec = jax.random.normal(k3, (B, D_IN), jnp.float32)

    # Branch 1: cat_msg=[False]  (msg == d_vec; enc-only kernel)
    out0 = jax.block_until_ready(model(d_vec, pre_vec, cur_d_vec,
                                       w=1.0, cat_msg=(False,)))
    ref0 = model.reference(d_vec, pre_vec, cur_d_vec, w=1.0, cat_msg=(False,))

    # Branch 2: cat_msg=[True]  (msg MLP + enc MLP fused in one kernel)
    out1 = jax.block_until_ready(model(d_vec, pre_vec, cur_d_vec,
                                       w=0.5, cat_msg=(True,)))
    ref1 = model.reference(d_vec, pre_vec, cur_d_vec, w=0.5, cat_msg=(True,))

    assert out0.shape == (B, D_IN) and out1.shape == (B, D_IN)
    assert jnp.allclose(out0, ref0, rtol=2e-2, atol=2e-2)
    assert jnp.allclose(out1, ref1, rtol=2e-2, atol=2e-2)

    # --- many nodes batched through one call: B=600 -> 2 grid steps of 304
    #     rows (v7x gets both TCs busy), ragged tail handled by masked block --
    B2 = 600
    dv2 = jax.random.normal(kb, (B2, D_IN), jnp.float32)
    pv2 = jax.random.normal(jax.random.fold_in(kb, 1), (B2, D_IN), jnp.float32)
    cv2 = jax.random.normal(jax.random.fold_in(kb, 2), (B2, D_IN), jnp.float32)
    out2 = jax.block_until_ready(model(dv2, pv2, cv2, w=0.3, cat_msg=(True,)))
    ref2 = model.reference(dv2, pv2, cv2, w=0.3, cat_msg=(True,))
    assert out2.shape == (B2, D_IN)
    assert jnp.allclose(out2, ref2, rtol=2e-2, atol=2e-2)

    # --- bf16 activation streaming (caller opt-in; halves input HBM bytes) ---
    dv_bf = dv2.astype(jnp.bfloat16)
    pv_bf = pv2.astype(jnp.bfloat16)
    cv_bf = cv2.astype(jnp.bfloat16)
    out3 = jax.block_until_ready(model(dv_bf, pv_bf, cv_bf,
                                       w=0.3, cat_msg=(True,)))
    ref3 = model.reference(dv_bf.astype(jnp.float32), pv_bf.astype(jnp.float32),
                           cv_bf.astype(jnp.float32), w=0.3, cat_msg=(True,))
    assert out3.shape == (B2, D_IN)
    assert jnp.allclose(out3, ref3, rtol=2e-2, atol=2e-2)

    print("KERNEL_OK")
</pallas_src>

<mosaic_0001>
module attributes {stable_mosaic.version = 11 : i64} {
  func.func @_enc_only_kernel(%arg0: i32, %arg1: memref<1xf32, #tpu.memory_space<smem>>, %arg2: memref<8x100xf32, #tpu.memory_space<vmem>>, %arg3: memref<8x100xf32, #tpu.memory_space<vmem>>, %arg4: memref<256x384xbf16, #tpu.memory_space<vmem>>, %arg5: memref<1x384xf32, #tpu.memory_space<vmem>>, %arg6: memref<384x128xbf16, #tpu.memory_space<vmem>>, %arg7: memref<1x128xf32, #tpu.memory_space<vmem>>, %arg8: memref<8x100xf32, #tpu.memory_space<vmem>>, %arg9: memref<8x256xbf16, #tpu.memory_space<vmem>>) attributes {dimension_semantics = [#tpu.dimension_semantics<parallel>], iteration_bounds = array<i64: 1>, scalar_prefetch = 1 : i64, scratch_operands = 1 : i64, tpu.core_type = #tpu.core_type<tc>, window_params = [{transform_indices = @transform_0, window_bounds = array<i64: 8, 100>}, {transform_indices = @transform_1, window_bounds = array<i64: 8, 100>}, {pipeline_mode = #tpu.pipeline_mode<synchronous>, transform_indices = @transform_2, window_bounds = array<i64: 256, 384>}, {pipeline_mode = #tpu.pipeline_mode<synchronous>, transform_indices = @transform_3, window_bounds = array<i64: 1, 384>}, {pipeline_mode = #tpu.pipeline_mode<synchronous>, transform_indices = @transform_4, window_bounds = array<i64: 384, 128>}, {pipeline_mode = #tpu.pipeline_mode<synchronous>, transform_indices = @transform_5, window_bounds = array<i64: 1, 128>}, {transform_indices = @transform_6, window_bounds = array<i64: 8, 100>}]} {
    %c0_i32 = arith.constant 0 : i32
    %0 = arith.cmpi eq, %arg0, %c0_i32 : i32
    %1 = arith.extui %0 : i1 to i32
    %c0_i32_0 = arith.constant 0 : i32
    %2 = arith.cmpi ne, %1, %c0_i32_0 : i32
    scf.if %2 {
      %cst_22 = arith.constant 0.000000e+00 : bf16
      %28 = vector.broadcast %cst_22 : bf16 to vector<8x256xbf16>
      %c0_23 = arith.constant 0 : index
      %c0_24 = arith.constant 0 : index
      %29 = vector.load %arg9[%c0_23, %c0_24] : memref<8x256xbf16, #tpu.memory_space<vmem>>, vector<8x256xbf16>
      tpu.vector_store %arg9[%c0_23, %c0_24], %28 {strides = array<i32>} : memref<8x256xbf16, #tpu.memory_space<vmem>>, vector<8x256xbf16>,
    } else {
    }
    %c0 = arith.constant 0 : index
    %c0_1 = arith.constant 0 : index
    %3 = vector.load %arg3[%c0, %c0_1] : memref<8x100xf32, #tpu.memory_space<vmem>>, vector<8x100xf32>
    %4 = arith.truncf %3 : vector<8x100xf32> to vector<8x100xbf16>
    %c0_2 = arith.constant 0 : index
    %c0_3 = arith.constant 0 : index
    %5 = vector.load %arg9[%c0_2, %c0_3] : memref<8x256xbf16, #tpu.memory_space<vmem>>, vector<8x100xbf16>
    tpu.vector_store %arg9[%c0_2, %c0_3], %4 {strides = array<i32>} : memref<8x256xbf16, #tpu.memory_space<vmem>>, vector<8x100xbf16>,
    %c0_4 = arith.constant 0 : index
    %c0_5 = arith.constant 0 : index
    %6 = vector.load %arg2[%c0_4, %c0_5] : memref<8x100xf32, #tpu.memory_space<vmem>>, vector<8x100xf32>
    %7 = arith.truncf %6 : vector<8x100xf32> to vector<8x100xbf16>
    %c0_6 = arith.constant 0 : index
    %c128 = arith.constant 128 : index
    %8 = vector.load %arg9[%c0_6, %c128] : memref<8x256xbf16, #tpu.memory_space<vmem>>, vector<8x100xbf16>
    tpu.vector_store %arg9[%c0_6, %c128], %7 {strides = array<i32>} : memref<8x256xbf16, #tpu.memory_space<vmem>>, vector<8x100xbf16>,
    %c0_7 = arith.constant 0 : index
    %c0_8 = arith.constant 0 : index
    %9 = vector.load %arg9[%c0_7, %c0_8] : memref<8x256xbf16, #tpu.memory_space<vmem>>, vector<8x256xbf16>
    %c0_9 = arith.constant 0 : index
    %c0_10 = arith.constant 0 : index
    %10 = vector.load %arg4[%c0_9, %c0_10] : memref<256x384xbf16, #tpu.memory_space<vmem>>, vector<256x384xbf16>
    %cst = arith.constant dense<0.000000e+00> : vector<8x384xf32>
    %11 = tpu.matmul %9, %10, %cst {dimension_numbers = #tpu.dot_dimension_numbers<[1], [0], [0], [1], [0, 0, 1, 1], [], []>} : vector<8x256xbf16>, vector<256x384xbf16>, vector<8x384xf32> -> vector<8x384xf32>
    %c0_11 = arith.constant 0 : index
    %c0_12 = arith.constant 0 : index
    %12 = vector.load %arg5[%c0_11, %c0_12] : memref<1x384xf32, #tpu.memory_space<vmem>>, vector<1x384xf32>
    %13 = vector.broadcast %12 : vector<1x384xf32> to vector<8x384xf32>
    %14 = arith.addf %11, %13 : vector<8x384xf32>
    %cst_13 = arith.constant 0.000000e+00 : f32
    %15 = vector.broadcast %cst_13 : f32 to vector<8x384xf32>
    %16 = arith.maximumf %14, %15 : vector<8x384xf32>
    %17 = arith.truncf %16 : vector<8x384xf32> to vector<8x384xbf16>
    %c0_14 = arith.constant 0 : index
    %c0_15 = arith.constant 0 : index
    %18 = vector.load %arg6[%c0_14, %c0_15] : memref<384x128xbf16, #tpu.memory_space<vmem>>, vector<384x128xbf16>
    %cst_16 = arith.constant dense<0.000000e+00> : vector<8x128xf32>
    %19 = tpu.matmul %17, %18, %cst_16 {dimension_numbers = #tpu.dot_dimension_numbers<[1], [0], [0], [1], [0, 0, 1, 1], [], []>} : vector<8x384xbf16>, vector<384x128xbf16>, vector<8x128xf32> -> vector<8x128xf32>
    %c0_17 = arith.constant 0 : index
    %c0_18 = arith.constant 0 : index
    %20 = vector.load %arg7[%c0_17, %c0_18] : memref<1x128xf32, #tpu.memory_space<vmem>>, vector<1x128xf32>
    %21 = vector.broadcast %20 : vector<1x128xf32> to vector<8x128xf32>
    %22 = arith.addf %19, %21 : vector<8x128xf32>
    %23 = vector.extract_strided_slice %22 {offsets = [0, 0], sizes = [8, 100], strides = [1, 1]} : vector<8x128xf32> to vector<8x100xf32>
    %c0_19 = arith.constant 0 : index
    %24 = memref.load %arg1[%c0_19] : memref<1xf32, #tpu.memory_space<smem>>
    %25 = vector.broadcast %24 : f32 to vector<8x100xf32>
    %26 = arith.mulf %23, %25 : vector<8x100xf32>
    %c0_20 = arith.constant 0 : index
    %c0_21 = arith.constant 0 : index
    %27 = vector.load %arg8[%c0_20, %c0_21] : memref<8x100xf32, #tpu.memory_space<vmem>>, vector<8x100xf32>
    tpu.vector_store %arg8[%c0_20, %c0_21], %26 {strides = array<i32>} : memref<8x100xf32, #tpu.memory_space<vmem>>, vector<8x100xf32>,
    return
  }
  func.func @transform_0(%arg0: i32, %arg1: memref<1xf32, #tpu.memory_space<smem>>) -> (i32, i32) {
    %c0_i32 = arith.constant 0 : i32
    %c0_i32_0 = arith.constant 0 : i32
    return %arg0, %c0_i32 : i32, i32
  }
  func.func @transform_1(%arg0: i32, %arg1: memref<1xf32, #tpu.memory_space<smem>>) -> (i32, i32) {
    %c0_i32 = arith.constant 0 : i32
    %c0_i32_0 = arith.constant 0 : i32
    return %arg0, %c0_i32 : i32, i32
  }
  func.func @transform_2(%arg0: i32, %arg1: memref<1xf32, #tpu.memory_space<smem>>) -> (i32, i32) {
    %c0_i32 = arith.constant 0 : i32
    %c0_i32_0 = arith.constant 0 : i32
    %c0_i32_1 = arith.constant 0 : i32
    return %c0_i32, %c0_i32_0 : i32, i32
  }
  func.func @transform_3(%arg0: i32, %arg1: memref<1xf32, #tpu.memory_space<smem>>) -> (i32, i32) {
    %c0_i32 = arith.constant 0 : i32
    %c0_i32_0 = arith.constant 0 : i32
    %c0_i32_1 = arith.constant 0 : i32
    return %c0_i32, %c0_i32_0 : i32, i32
  }
  func.func @transform_4(%arg0: i32, %arg1: memref<1xf32, #tpu.memory_space<smem>>) -> (i32, i32) {
    %c0_i32 = arith.constant 0 : i32
    %c0_i32_0 = arith.constant 0 : i32
    %c0_i32_1 = arith.constant 0 : i32
    return %c0_i32, %c0_i32_0 : i32, i32
  }
  func.func @transform_5(%arg0: i32, %arg1: memref<1xf32, #tpu.memory_space<smem>>) -> (i32, i32) {
    %c0_i32 = arith.constant 0 : i32
    %c0_i32_0 = arith.constant 0 : i32
    %c0_i32_1 = arith.constant 0 : i32
    return %c0_i32, %c0_i32_0 : i32, i32
  }
  func.func @transform_6(%arg0: i32, %arg1: memref<1xf32, #tpu.memory_space<smem>>) -> (i32, i32) {
    %c0_i32 = arith.constant 0 : i32
    %c0_i32_0 = arith.constant 0 : i32
    return %arg0, %c0_i32 : i32, i32
  }
}

</mosaic_0001>

<llo_original>
// kernel: _forward.1
$region0: #{_forward.1}
  #allocation0 [shape = 'u32[]', space=smem, size = 0x4, offset = 0x4, fixed_abs, tag = 'smem constant byte address 0x4 - core index']
  #allocation1 [shape = 'u32[144,128]{1,0:T(1,128)}', space=vmem, size = 0x12000, scoped, tag = 'internal scratch']
  #allocation2 [shape = 'bf16[8,256]{1,0:T(8,128)(2,1)}', space=vmem, size = 0x1000, scoped, tag = 'scratch operand']
  #allocation3 [shape = 's32[1]{0}', space=sflag, size = 0x4, scoped, tag = 'scoped memory for _forward.1']
  #allocation4 [shape = 'f32[1]{0:T(128)S(6)}', space=smem, size = 0x200, scoped, tag = 'prefetched SMEM operand 0']
  %s0 = inlined_call_operand.<no memory space> [shape: f32[1], index: 0, kind: input, shape index: {}]
  %s1 = inlined_call_operand.vmem [shape: f32[6,100], index: 1, kind: input, shape index: {}]
  %s2 = inlined_call_operand.vmem [shape: f32[6,100], index: 2, kind: input, shape index: {}]
  %s3 = inlined_call_operand.vmem [shape: bf16[256,384], index: 3, kind: input, shape index: {}]
  %s4 = inlined_call_operand.vmem [shape: f32[1,384], index: 4, kind: input, shape index: {}]
  %s5 = inlined_call_operand.vmem [shape: bf16[384,128], index: 5, kind: input, shape index: {}]
  %s6 = inlined_call_operand.vmem [shape: f32[1,128], index: 6, kind: input, shape index: {}]
  %s7 = inlined_call_operand.hbm [shape: f32[6,100], index: 7, kind: output, shape index: {}]
  %s8 = sld [smem:[#allocation0]]
  $region38: #{_forward.1} parent=0
    _
  %s10 = ssub.s32 1, %s8
  %s11 = scalar_select 0, %s10, %s8
  %12 = sst [smem:[#allocation4]] %s0
  $region1: #{_forward.1} parent=0
    #allocation5 [shape = 'u8[4096]{0}', space=vmem, size = 0x1000, scoped, tag = 'output window, operand 0, single buffered']
    #allocation6 [shape = 's32[1]{0}', space=sflag, size = 0x4, scoped, tag = 'scoped memory for _forward.1']
    %13 = vsyncpa [#allocation6], 0
    // Predicated region
    $region2: #{_forward.1} parent=1 // pred_check
      _
    $region3: #{_forward.1} parent=1 // pred_check_branch
      %15 = sbr.rel (0) target = $region5
    $region4: #{_forward.1} parent=1 // pred_region
      _
    $region5: #{_forward.1} parent=1 // pred_fallthru
      _
    // Predicated region
    $region6: #{_forward.1} parent=1 // pred_check
      _
    $region7: #{_forward.1} parent=1 // pred_check_branch
      %17 = sbr.rel (0) target = $region9
    $region8: #{_forward.1} parent=1 // pred_region
      _
    $region9: #{_forward.1} parent=1 // pred_fallthru
      _
    // Predicated region
    $region10: #{_forward.1} parent=1 // pred_check
      _
    $region11: #{_forward.1} parent=1 // pred_check_branch
      %19 = sbr.rel (0) target = $region13
    $region12: #{_forward.1} parent=1 // pred_region
      _
    $region13: #{_forward.1} parent=1 // pred_fallthru
      _
    // Predicated region
    $region14: #{_forward.1} parent=1 // pred_check
      _
    $region15: #{_forward.1} parent=1 // pred_check_branch
      %21 = sbr.rel (0) target = $region17
    $region16: #{_forward.1} parent=1 // pred_region
      _
    $region17: #{_forward.1} parent=1 // pred_fallthru
      _
    // Predicated region
    $region18: #{_forward.1} parent=1 // pred_check
      _
    $region19: #{_forward.1} parent=1 // pred_check_branch
      %23 = sbr.rel (0) target = $region21
    $region20: #{_forward.1} parent=1 // pred_region
      _
    $region21: #{_forward.1} parent=1 // pred_fallthru
      _
    // Predicated region
    $region22: #{_forward.1} parent=1 // pred_check
      _
    $region23: #{_forward.1} parent=1 // pred_check_branch
      %25 = sbr.rel (0) target = $region25
    $region24: #{_forward.1} parent=1 // pred_region
      _
    $region25: #{_forward.1} parent=1 // pred_fallthru
      _
    %p27 = scmp.eq.s32.totalorder 0, 0
    // Predicated region
    $region26: #{_forward.1} parent=1 // pred_check
      %p28 = pneg %p27
    $region27: #{_forward.1} parent=1 // pred_check_branch
      %30 = sbr.rel (%p28) target = $region29
    $region28: #{_forward.1} parent=1 // pred_region
      %31 = vst [vmem:[#allocation2] sm:$0xff] 0
    $region29: #{_forward.1} parent=1 // pred_fallthru
      _
    %v32 = vld [vmem:[%s2] sm:$0xff]
    %v33 = vpack.c.bf16 %v32, %v32
    %vm34 = vcmask 814080
    %35 = vst.msk [vmem:[#allocation2] sm:$0xf] %vm34, %v33
    %v36 = vld [vmem:[%s1] sm:$0xff]
    %v37 = vpack.c.bf16 %v36, %v36
    %38 = vst.msk [vmem:[#allocation2 + $0x4] sm:$0xf] %vm34, %v37
    %v39 = vld [vmem:[#allocation2] sm:$0xff]
    %v40 = vld [vmem:[%s3] sm:$0xff]
    %v41 = vld [vmem:[%s3 + $0x8] sm:$0xf]
    %v42 = vld [vmem:[%s3 + $0xc] sm:$0xff]
    %v43 = vld [vmem:[%s3 + $0x14] sm:$0xf]
    %v44 = vld [vmem:[%s3 + $0x18] sm:$0xff]
    %v45 = vld [vmem:[%s3 + $0x20] sm:$0xf]
    %v46 = vld [vmem:[%s3 + $0x24] sm:$0xff]
    %v47 = vld [vmem:[%s3 + $0x2c] sm:$0xf]
    %v48 = vld [vmem:[%s3 + $0x30] sm:$0xff]
    %v49 = vld [vmem:[%s3 + $0x38] sm:$0xf]
    %v50 = vld [vmem:[%s3 + $0x3c] sm:$0xff]
    %v51 = vld [vmem:[%s3 + $0x44] sm:$0xf]
    %v52 = vld [vmem:[%s3 + $0x48] sm:$0xff]
    %v53 = vld [vmem:[%s3 + $0x50] sm:$0xf]
    %v54 = vld [vmem:[%s3 + $0x54] sm:$0xff]
    %v55 = vld [vmem:[%s3 + $0x5c] sm:$0xf]
    %v56 = vld [vmem:[%s3 + $0x60] sm:$0xff]
    %v57 = vld [vmem:[%s3 + $0x68] sm:$0xf]
    %v58 = vld [vmem:[%s3 + $0x6c] sm:$0xff]
    %v59 = vld [vmem:[%s3 + $0x74] sm:$0xf]
    %v60 = vld [vmem:[%s3 + $0x78] sm:$0xff]
    %v61 = vld [vmem:[%s3 + $0x80] sm:$0xf]
    %v62 = vld [vmem:[%s3 + $0x84] sm:$0xff]
    %v63 = vld [vmem:[%s3 + $0x8c] sm:$0xf]
    %v64 = vld [vmem:[%s3 + $0x90] sm:$0xff]
    %v65 = vld [vmem:[%s3 + $0x98] sm:$0xf]
    %v66 = vld [vmem:[%s3 + $0x9c] sm:$0xff]
    %v67 = vld [vmem:[%s3 + $0xa4] sm:$0xf]
    %v68 = vld [vmem:[%s3 + $0xa8] sm:$0xff]
    %v69 = vld [vmem:[%s3 + $0xb0] sm:$0xf]
    %v70 = vld [vmem:[%s3 + $0xb4] sm:$0xff]
    %v71 = vld [vmem:[%s3 + $0xbc] sm:$0xf]
    %v72 = vld [vmem:[%s3 + $0xc0] sm:$0xff]
    %v73 = vld [vmem:[%s3 + $0xc8] sm:$0xf]
    %v74 = vld [vmem:[%s3 + $0xcc] sm:$0xff]
    %v75 = vld [vmem:[%s3 + $0xd4] sm:$0xf]
    %v76 = vld [vmem:[%s3 + $0xd8] sm:$0xff]
    %v77 = vld [vmem:[%s3 + $0xe0] sm:$0xf]
    %v78 = vld [vmem:[%s3 + $0xe4] sm:$0xff]
    %v79 = vld [vmem:[%s3 + $0xec] sm:$0xf]
    %v80 = vld [vmem:[%s3 + $0xf0] sm:$0xff]
    %v81 = vld [vmem:[%s3 + $0xf8] sm:$0xf]
    %v82 = vld [vmem:[%s3 + $0xfc] sm:$0xff]
    %v83 = vld [vmem:[%s3 + $0x104] sm:$0xf]
    %v84 = vld [vmem:[%s3 + $0x108] sm:$0xff]
    %v85 = vld [vmem:[%s3 + $0x110] sm:$0xf]
    %v86 = vld [vmem:[%s3 + $0x114] sm:$0xff]
    %v87 = vld [vmem:[%s3 + $0x11c] sm:$0xf]
    %v88 = vld [vmem:[%s3 + $0x120] sm:$0xff]
    %v89 = vld [vmem:[%s3 + $0x128] sm:$0xf]
    %v90 = vld [vmem:[%s3 + $0x12c] sm:$0xff]
    %v91 = vld [vmem:[%s3 + $0x134] sm:$0xf]
    %v92 = vld [vmem:[%s3 + $0x138] sm:$0xff]
    %v93 = vld [vmem:[%s3 + $0x140] sm:$0xf]
    %v94 = vld [vmem:[%s3 + $0x144] sm:$0xff]
    %v95 = vld [vmem:[%s3 + $0x14c] sm:$0xf]
    %v96 = vld [vmem:[%s3 + $0x150] sm:$0xff]
    %v97 = vld [vmem:[%s3 + $0x158] sm:$0xf]
    %v98 = vld [vmem:[%s3 + $0x15c] sm:$0xff]
    %v99 = vld [vmem:[%s3 + $0x164] sm:$0xf]
    %v100 = vld [vmem:[%s3 + $0x168] sm:$0xff]
    %v101 = vld [vmem:[%s3 + $0x170] sm:$0xf]
    %v102 = vld [vmem:[%s3 + $0x174] sm:$0xff]
    %v103 = vld [vmem:[%s3 + $0x17c] sm:$0xf]
    %v104 = vld [vmem:[%s4] sm:$0x7]
    %v106 = vlaneseq
    %v107 = vshrl.u32 %v106, 7
    %v108 = vsub.s32 0, %v107
    %v109 = vrot.slane %v104, %v108
    %v110 = vlaneseq
    %v111 = vshrl.u32 %v110, 7
    %v112 = vsub.s32 1, %v111
    %v113 = vrot.slane %v104, %v112
    %v114 = vlaneseq
    %v115 = vshrl.u32 %v114, 7
    %v116 = vsub.s32 2, %v115
    %v117 = vrot.slane %v104, %v116
    %v122 = vunpack.c.l.b16 %v39
    %v123 = vunpack.c.h.b16 %v39
    %v124 = vpack.c.b16 %v122, %v122
    %v125 = vpack.c.b16 %v123, %v123
    %v192 = vunpack.c.l.b16 %v40
    %v193 = vunpack.c.h.b16 %v40
    %v194 = vunpack.c.l.b16 %v41
    %v195 = vunpack.c.l.b16 %v42
    %v196 = vunpack.c.h.b16 %v42
    %v197 = vunpack.c.l.b16 %v43
    %v198 = vunpack.c.l.b16 %v44
    %v199 = vunpack.c.h.b16 %v44
    %v200 = vunpack.c.l.b16 %v45
    %v201 = vunpack.c.l.b16 %v46
    %v202 = vunpack.c.h.b16 %v46
    %v203 = vunpack.c.l.b16 %v47
    %v204 = vunpack.c.l.b16 %v48
    %v205 = vunpack.c.h.b16 %v48
    %v206 = vunpack.c.l.b16 %v49
    %v207 = vunpack.c.l.b16 %v50
    %v208 = vunpack.c.h.b16 %v50
    %v209 = vunpack.c.l.b16 %v51
    %v210 = vunpack.c.l.b16 %v52
    %v211 = vunpack.c.h.b16 %v52
    %v212 = vunpack.c.l.b16 %v53
    %v213 = vunpack.c.l.b16 %v54
    %v214 = vunpack.c.h.b16 %v54
    %v215 = vunpack.c.l.b16 %v55
    %v216 = vunpack.c.l.b16 %v56
    %v217 = vunpack.c.h.b16 %v56
    %v218 = vunpack.c.l.b16 %v57
    %v219 = vunpack.c.l.b16 %v58
    %v220 = vunpack.c.h.b16 %v58
    %v221 = vunpack.c.l.b16 %v59
    %v222 = vunpack.c.l.b16 %v60
    %v223 = vunpack.c.h.b16 %v60
    %v224 = vunpack.c.l.b16 %v61
    %v225 = vunpack.c.l.b16 %v62
    %v226 = vunpack.c.h.b16 %v62
    %v227 = vunpack.c.l.b16 %v63
    %v228 = vunpack.c.l.b16 %v64
    %v229 = vunpack.c.h.b16 %v64
    %v230 = vunpack.c.l.b16 %v65
    %v231 = vunpack.c.l.b16 %v66
    %v232 = vunpack.c.h.b16 %v66
    %v233 = vunpack.c.l.b16 %v67
    %v234 = vunpack.c.l.b16 %v68
    %v235 = vunpack.c.h.b16 %v68
    %v236 = vunpack.c.l.b16 %v69
    %v237 = vunpack.c.l.b16 %v70
    %v238 = vunpack.c.h.b16 %v70
    %v239 = vunpack.c.l.b16 %v71
    %v240 = vunpack.c.l.b16 %v72
    %v241 = vunpack.c.h.b16 %v72
    %v242 = vunpack.c.l.b16 %v73
    %v243 = vunpack.c.l.b16 %v74
    %v244 = vunpack.c.h.b16 %v74
    %v245 = vunpack.c.l.b16 %v75
    %v246 = vunpack.c.l.b16 %v76
    %v247 = vunpack.c.h.b16 %v76
    %v248 = vunpack.c.l.b16 %v77
    %v249 = vunpack.c.l.b16 %v78
    %v250 = vunpack.c.h.b16 %v78
    %v251 = vunpack.c.l.b16 %v79
    %v252 = vunpack.c.l.b16 %v80
    %v253 = vunpack.c.h.b16 %v80
    %v254 = vunpack.c.l.b16 %v81
    %v255 = vunpack.c.l.b16 %v82
    %v256 = vunpack.c.h.b16 %v82
    %v257 = vunpack.c.l.b16 %v83
    %v258 = vunpack.c.l.b16 %v84
    %v259 = vunpack.c.h.b16 %v84
    %v260 = vunpack.c.l.b16 %v85
    %v261 = vunpack.c.l.b16 %v86
    %v262 = vunpack.c.h.b16 %v86
    %v263 = vunpack.c.l.b16 %v87
    %v264 = vunpack.c.l.b16 %v88
    %v265 = vunpack.c.h.b16 %v88
    %v266 = vunpack.c.l.b16 %v89
    %v267 = vunpack.c.l.b16 %v90
    %v268 = vunpack.c.h.b16 %v90
    %v269 = vunpack.c.l.b16 %v91
    %v270 = vunpack.c.l.b16 %v92
    %v271 = vunpack.c.h.b16 %v92
    %v272 = vunpack.c.l.b16 %v93
    %v273 = vunpack.c.l.b16 %v94
    %v274 = vunpack.c.h.b16 %v94
    %v275 = vunpack.c.l.b16 %v95
    %v276 = vunpack.c.l.b16 %v96
    %v277 = vunpack.c.h.b16 %v96
    %v278 = vunpack.c.l.b16 %v97
    %v279 = vunpack.c.l.b16 %v98
    %v280 = vunpack.c.h.b16 %v98
    %v281 = vunpack.c.l.b16 %v99
    %v282 = vunpack.c.l.b16 %v100
    %v283 = vunpack.c.h.b16 %v100
    %v284 = vunpack.c.l.b16 %v101
    %v285 = vunpack.c.l.b16 %v102
    %v286 = vunpack.c.h.b16 %v102
    %v287 = vunpack.c.l.b16 %v103
    %v288 = vpack.c.b16 %v195, %v192
    %v289 = vpack.c.b16 %v196, %v193
    %v290 = vpack.c.b16 %v197, %v194
    %v291 = vpack.c.b16 %v201, %v198
    %v292 = vpack.c.b16 %v202, %v199
    %v293 = vpack.c.b16 %v203, %v200
    %v294 = vpack.c.b16 %v207, %v204
    %v295 = vpack.c.b16 %v208, %v205
    %v296 = vpack.c.b16 %v209, %v206
    %v297 = vpack.c.b16 %v213, %v210
    %v298 = vpack.c.b16 %v214, %v211
    %v299 = vpack.c.b16 %v215, %v212
    %v300 = vpack.c.b16 %v219, %v216
    %v301 = vpack.c.b16 %v220, %v217
    %v302 = vpack.c.b16 %v221, %v218
    %v303 = vpack.c.b16 %v225, %v222
    %v304 = vpack.c.b16 %v226, %v223
    %v305 = vpack.c.b16 %v227, %v224
    %v306 = vpack.c.b16 %v231, %v228
    %v307 = vpack.c.b16 %v232, %v229
    %v308 = vpack.c.b16 %v233, %v230
    %v309 = vpack.c.b16 %v237, %v234
    %v310 = vpack.c.b16 %v238, %v235
    %v311 = vpack.c.b16 %v239, %v236
    %v312 = vpack.c.b16 %v243, %v240
    %v313 = vpack.c.b16 %v244, %v241
    %v314 = vpack.c.b16 %v245, %v242
    %v315 = vpack.c.b16 %v249, %v246
    %v316 = vpack.c.b16 %v250, %v247
    %v317 = vpack.c.b16 %v251, %v248
    %v318 = vpack.c.b16 %v255, %v252
    %v319 = vpack.c.b16 %v256, %v253
    %v320 = vpack.c.b16 %v257, %v254
    %v321 = vpack.c.b16 %v261, %v258
    %v322 = vpack.c.b16 %v262, %v259
    %v323 = vpack.c.b16 %v263, %v260
    %v324 = vpack.c.b16 %v267, %v264
    %v325 = vpack.c.b16 %v268, %v265
    %v326 = vpack.c.b16 %v269, %v266
    %v327 = vpack.c.b16 %v273, %v270
    %v328 = vpack.c.b16 %v274, %v271
    %v329 = vpack.c.b16 %v275, %v272
    %v330 = vpack.c.b16 %v279, %v276
    %v331 = vpack.c.b16 %v280, %v277
    %v332 = vpack.c.b16 %v281, %v278
    %v333 = vpack.c.b16 %v285, %v282
    %v334 = vpack.c.b16 %v286, %v283
    %v335 = vpack.c.b16 %v287, %v284
    %384 = vmatprep.subr.bf16.mxu0 %v289
    %385 = vmatpush1.bf16.msra.mxu0 %v288
    %386 = vmatprep.subr.bf16.mxu0 %v292
    %387 = vmatpush1.bf16.msra.mxu0 %v291
    %388 = vmatprep.subr.bf16.mxu0 %v295
    %389 = vmatpush1.bf16.msra.mxu0 %v294
    %390 = vmatprep.subr.bf16.mxu0 %v298
    %391 = vmatpush1.bf16.msra.mxu0 %v297
    %392 = vmatprep.subr.bf16.mxu0 %v301
    %393 = vmatpush1.bf16.msra.mxu0 %v300
    %394 = vmatprep.subr.bf16.mxu0 %v304
    %395 = vmatpush1.bf16.msra.mxu0 %v303
    %396 = vmatprep.subr.bf16.mxu0 %v307
    %397 = vmatpush1.bf16.msra.mxu0 %v306
    %398 = vmatprep.subr.bf16.mxu0 %v310
    %399 = vmatpush1.bf16.msra.mxu0 %v309
    %400 = vmatprep.subr.bf16.mxu0 %v313
    %401 = vmatpush1.bf16.msra.mxu0 %v312
    %402 = vmatprep.subr.bf16.mxu0 %v316
    %403 = vmatpush1.bf16.msra.mxu0 %v315
    %404 = vmatprep.subr.bf16.mxu0 %v319
    %405 = vmatpush1.bf16.msra.mxu0 %v318
    %406 = vmatprep.subr.bf16.mxu0 %v322
    %407 = vmatpush1.bf16.msra.mxu0 %v321
    %408 = vmatprep.subr.bf16.mxu0 %v325
    %409 = vmatpush1.bf16.msra.mxu0 %v324
    %410 = vmatprep.subr.bf16.mxu0 %v328
    %411 = vmatpush1.bf16.msra.mxu0 %v327
    %412 = vmatprep.subr.bf16.mxu0 %v331
    %413 = vmatpush1.bf16.msra.mxu0 %v330
    %414 = vmatprep.subr.bf16.mxu0 %v334
    %415 = vmatpush1.bf16.msra.mxu0 %v333
    %416 = vmatprep.mubr.bf16.mxu0 %v125
    %417 = vmatmul.mubr.bf16.gmra.mrb[0].mxu0 %v124
    %v418 = vpop.f32.mrb[0].mxu0
    %v419 = vadd.f32 %v109, %v418
    %v420 = vpop.f32.mrb[0].mxu0
    %v421 = vadd.f32 %v113, %v420
    %v422 = vpop.f32.mrb[0].mxu0
    %v423 = vpop.f32.mrb[0].mxu0
    %424 = vdwg.mxu0
    %425 = vmatprep.subr.bf16.mxu0 0
    %426 = vmatpush1.bf16.msra.mxu0 %v290
    %427 = vmatprep.subr.bf16.mxu0 0
    %428 = vmatpush1.bf16.msra.mxu0 %v293
    %429 = vmatprep.subr.bf16.mxu0 0
    %430 = vmatpush1.bf16.msra.mxu0 %v296
    %431 = vmatprep.subr.bf16.mxu0 0
    %432 = vmatpush1.bf16.msra.mxu0 %v299
    %433 = vmatprep.subr.bf16.mxu0 0
    %434 = vmatpush1.bf16.msra.mxu0 %v302
    %435 = vmatprep.subr.bf16.mxu0 0
    %436 = vmatpush1.bf16.msra.mxu0 %v305
    %437 = vmatprep.subr.bf16.mxu0 0
    %438 = vmatpush1.bf16.msra.mxu0 %v308
    %439 = vmatprep.subr.bf16.mxu0 0
    %440 = vmatpush1.bf16.msra.mxu0 %v311
    %441 = vmatprep.subr.bf16.mxu0 0
    %442 = vmatpush1.bf16.msra.mxu0 %v314
    %443 = vmatprep.subr.bf16.mxu0 0
    %444 = vmatpush1.bf16.msra.mxu0 %v317
    %445 = vmatprep.subr.bf16.mxu0 0
    %446 = vmatpush1.bf16.msra.mxu0 %v320
    %447 = vmatprep.subr.bf16.mxu0 0
    %448 = vmatpush1.bf16.msra.mxu0 %v323
    %449 = vmatprep.subr.bf16.mxu0 0
    %450 = vmatpush1.bf16.msra.mxu0 %v326
    %451 = vmatprep.subr.bf16.mxu0 0
    %452 = vmatpush1.bf16.msra.mxu0 %v329
    %453 = vmatprep.subr.bf16.mxu0 0
    %454 = vmatpush1.bf16.msra.mxu0 %v332
    %455 = vmatprep.subr.bf16.mxu0 0
    %456 = vmatpush1.bf16.msra.mxu0 %v335
    %457 = vmatprep.mubr.bf16.mxu0 %v125
    %458 = vmatmul.mubr.bf16.gmra.mrb[0].mxu0 %v124
    %v459 = vpop.f32.mrb[0].mxu0
    %v460 = vadd.f32 %v117, %v459
    %v461 = vpop.f32.mrb[0].mxu0
    %v462 = vpop.f32.mrb[0].mxu0
    %v463 = vpop.f32.mrb[0].mxu0
    %464 = vdwg.mxu0
    %v465 = vmax.f32 %v419, 0.0
    %v466 = vmax.f32 %v421, 0.0
    %v467 = vmax.f32 %v460, 0.0
    %v468 = vpack.c.bf16 %v465, %v465
    %v469 = vpack.c.bf16 %v466, %v466
    %v470 = vpack.c.bf16 %v467, %v467
    %v471 = vld [vmem:[%s5] sm:$0xf]
    %v472 = vld [vmem:[%s5 + $0x4] sm:$0xf]
    %v473 = vld [vmem:[%s5 + $0x8] sm:$0xf]
    %v474 = vld [vmem:[%s5 + $0xc] sm:$0xf]
    %v475 = vld [vmem:[%s5 + $0x10] sm:$0xf]
    %v476 = vld [vmem:[%s5 + $0x14] sm:$0xf]
    %v477 = vld [vmem:[%s5 + $0x18] sm:$0xf]
    %v478 = vld [vmem:[%s5 + $0x1c] sm:$0xf]
    %v479 = vld [vmem:[%s5 + $0x20] sm:$0xf]
    %v480 = vld [vmem:[%s5 + $0x24] sm:$0xf]
    %v481 = vld [vmem:[%s5 + $0x28] sm:$0xf]
    %v482 = vld [vmem:[%s5 + $0x2c] sm:$0xf]
    %v483 = vld [vmem:[%s5 + $0x30] sm:$0xf]
    %v484 = vld [vmem:[%s5 + $0x34] sm:$0xf]
    %v485 = vld [vmem:[%s5 + $0x38] sm:$0xf]
    %v486 = vld [vmem:[%s5 + $0x3c] sm:$0xf]
    %v487 = vld [vmem:[%s5 + $0x40] sm:$0xf]
    %v488 = vld [vmem:[%s5 + $0x44] sm:$0xf]
    %v489 = vld [vmem:[%s5 + $0x48] sm:$0xf]
    %v490 = vld [vmem:[%s5 + $0x4c] sm:$0xf]
    %v491 = vld [vmem:[%s5 + $0x50] sm:$0xf]
    %v492 = vld [vmem:[%s5 + $0x54] sm:$0xf]
    %v493 = vld [vmem:[%s5 + $0x58] sm:$0xf]
    %v494 = vld [vmem:[%s5 + $0x5c] sm:$0xf]
    %v495 = vld [vmem:[%s5 + $0x60] sm:$0xf]
    %v496 = vld [vmem:[%s5 + $0x64] sm:$0xf]
    %v497 = vld [vmem:[%s5 + $0x68] sm:$0xf]
    %v498 = vld [vmem:[%s5 + $0x6c] sm:$0xf]
    %v499 = vld [vmem:[%s5 + $0x70] sm:$0xf]
    %v500 = vld [vmem:[%s5 + $0x74] sm:$0xf]
    %v501 = vld [vmem:[%s5 + $0x78] sm:$0xf]
    %v502 = vld [vmem:[%s5 + $0x7c] sm:$0xf]
    %v503 = vld [vmem:[%s5 + $0x80] sm:$0xf]
    %v504 = vld [vmem:[%s5 + $0x84] sm:$0xf]
    %v505 = vld [vmem:[%s5 + $0x88] sm:$0xf]
    %v506 = vld [vmem:[%s5 + $0x8c] sm:$0xf]
    %v507 = vld [vmem:[%s5 + $0x90] sm:$0xf]
    %v508 = vld [vmem:[%s5 + $0x94] sm:$0xf]
    %v509 = vld [vmem:[%s5 + $0x98] sm:$0xf]
    %v510 = vld [vmem:[%s5 + $0x9c] sm:$0xf]
    %v511 = vld [vmem:[%s5 + $0xa0] sm:$0xf]
    %v512 = vld [vmem:[%s5 + $0xa4] sm:$0xf]
    %v513 = vld [vmem:[%s5 + $0xa8] sm:$0xf]
    %v514 = vld [vmem:[%s5 + $0xac] sm:$0xf]
    %v515 = vld [vmem:[%s5 + $0xb0] sm:$0xf]
    %v516 = vld [vmem:[%s5 + $0xb4] sm:$0xf]
    %v517 = vld [vmem:[%s5 + $0xb8] sm:$0xf]
    %v518 = vld [vmem:[%s5 + $0xbc] sm:$0xf]
    %v519 = vld [vmem:[%s6] sm:$0x1]
    %v521 = vlaneseq
    %v522 = vshrl.u32 %v521, 7
    %v523 = vsub.s32 0, %v522
    %v524 = vrot.slane %v519, %v523
    %v574 = vunpack.c.l.b16 %v471
    %v575 = vunpack.c.l.b16 %v472
    %v576 = vunpack.c.l.b16 %v473
    %v577 = vunpack.c.l.b16 %v474
    %v578 = vunpack.c.l.b16 %v475
    %v579 = vunpack.c.l.b16 %v476
    %v580 = vunpack.c.l.b16 %v477
    %v581 = vunpack.c.l.b16 %v478
    %v582 = vunpack.c.l.b16 %v479
    %v583 = vunpack.c.l.b16 %v480
    %v584 = vunpack.c.l.b16 %v481
    %v585 = vunpack.c.l.b16 %v482
    %v586 = vunpack.c.l.b16 %v483
    %v587 = vunpack.c.l.b16 %v484
    %v588 = vunpack.c.l.b16 %v485
    %v589 = vunpack.c.l.b16 %v486
    %v590 = vunpack.c.l.b16 %v487
    %v591 = vunpack.c.l.b16 %v488
    %v592 = vunpack.c.l.b16 %v489
    %v593 = vunpack.c.l.b16 %v490
    %v594 = vunpack.c.l.b16 %v491
    %v595 = vunpack.c.l.b16 %v492
    %v596 = vunpack.c.l.b16 %v493
    %v597 = vunpack.c.l.b16 %v494
    %v598 = vunpack.c.l.b16 %v495
    %v599 = vunpack.c.l.b16 %v496
    %v600 = vunpack.c.l.b16 %v497
    %v601 = vunpack.c.l.b16 %v498
    %v602 = vunpack.c.l.b16 %v499
    %v603 = vunpack.c.l.b16 %v500
    %v604 = vunpack.c.l.b16 %v501
    %v605 = vunpack.c.l.b16 %v502
    %v606 = vunpack.c.l.b16 %v503
    %v607 = vunpack.c.l.b16 %v504
    %v608 = vunpack.c.l.b16 %v505
    %v609 = vunpack.c.l.b16 %v506
    %v610 = vunpack.c.l.b16 %v507
    %v611 = vunpack.c.l.b16 %v508
    %v612 = vunpack.c.l.b16 %v509
    %v613 = vunpack.c.l.b16 %v510
    %v614 = vunpack.c.l.b16 %v511
    %v615 = vunpack.c.l.b16 %v512
    %v616 = vunpack.c.l.b16 %v513
    %v617 = vunpack.c.l.b16 %v514
    %v618 = vunpack.c.l.b16 %v515
    %v619 = vunpack.c.l.b16 %v516
    %v620 = vunpack.c.l.b16 %v517
    %v621 = vunpack.c.l.b16 %v518
    %v622 = vpack.c.b16 %v575, %v574
    %v623 = vpack.c.b16 %v577, %v576
    %v624 = vpack.c.b16 %v579, %v578
    %v625 = vpack.c.b16 %v581, %v580
    %v626 = vpack.c.b16 %v583, %v582
    %v627 = vpack.c.b16 %v585, %v584
    %v628 = vpack.c.b16 %v587, %v586
    %v629 = vpack.c.b16 %v589, %v588
    %v630 = vpack.c.b16 %v591, %v590
    %v631 = vpack.c.b16 %v593, %v592
    %v632 = vpack.c.b16 %v595, %v594
    %v633 = vpack.c.b16 %v597, %v596
    %v634 = vpack.c.b16 %v599, %v598
    %v635 = vpack.c.b16 %v601, %v600
    %v636 = vpack.c.b16 %v603, %v602
    %v637 = vpack.c.b16 %v605, %v604
    %v638 = vpack.c.b16 %v607, %v606
    %v639 = vpack.c.b16 %v609, %v608
    %v640 = vpack.c.b16 %v611, %v610
    %v641 = vpack.c.b16 %v613, %v612
    %v642 = vpack.c.b16 %v615, %v614
    %v643 = vpack.c.b16 %v617, %v616
    %v644 = vpack.c.b16 %v619, %v618
    %v645 = vpack.c.b16 %v621, %v620
    %670 = vmatprep.subr.bf16.mxu0 0
    %671 = vmatpush1.bf16.msra.mxu0 %v622
    %672 = vmatprep.subr.bf16.mxu0 0
    %673 = vmatpush1.bf16.msra.mxu0 %v623
    %674 = vmatprep.subr.bf16.mxu0 0
    %675 = vmatpush1.bf16.msra.mxu0 %v624
    %676 = vmatprep.subr.bf16.mxu0 0
    %677 = vmatpush1.bf16.msra.mxu0 %v625
    %678 = vmatprep.subr.bf16.mxu0 0
    %679 = vmatpush1.bf16.msra.mxu0 %v626
    %680 = vmatprep.subr.bf16.mxu0 0
    %681 = vmatpush1.bf16.msra.mxu0 %v627
    %682 = vmatprep.subr.bf16.mxu0 0
    %683 = vmatpush1.bf16.msra.mxu0 %v628
    %684 = vmatprep.subr.bf16.mxu0 0
    %685 = vmatpush1.bf16.msra.mxu0 %v629
    %686 = vmatprep.subr.bf16.mxu0 0
    %687 = vmatpush1.bf16.msra.mxu0 %v630
    %688 = vmatprep.subr.bf16.mxu0 0
    %689 = vmatpush1.bf16.msra.mxu0 %v631
    %690 = vmatprep.subr.bf16.mxu0 0
    %691 = vmatpush1.bf16.msra.mxu0 %v632
    %692 = vmatprep.subr.bf16.mxu0 0
    %693 = vmatpush1.bf16.msra.mxu0 %v633
    %694 = vmatprep.subr.bf16.mxu0 0
    %695 = vmatpush1.bf16.msra.mxu0 %v634
    %696 = vmatprep.subr.bf16.mxu0 0
    %697 = vmatpush1.bf16.msra.mxu0 %v635
    %698 = vmatprep.subr.bf16.mxu0 0
    %699 = vmatpush1.bf16.msra.mxu0 %v636
    %700 = vmatprep.subr.bf16.mxu0 0
    %701 = vmatpush1.bf16.msra.mxu0 %v637
    %702 = vmatprep.mubr.bf16.mxu0 %v469
    %703 = vmatmul.mubr.bf16.gmra.mrb[0].mxu0 %v468
    %v704 = vpop.f32.mrb[0].mxu0
    %v705 = vadd.f32 %v524, %v704
    %v706 = vpop.f32.mrb[0].mxu0
    %v707 = vpop.f32.mrb[0].mxu0
    %v708 = vpop.f32.mrb[0].mxu0
    %709 = vdwg.mxu0
    %710 = vmatprep.subr.bf16.mxu0 0
    %711 = vmatpush1.bf16.msra.mxu0 %v638
    %712 = vmatprep.subr.bf16.mxu0 0
    %713 = vmatpush1.bf16.msra.mxu0 %v639
    %714 = vmatprep.subr.bf16.mxu0 0
    %715 = vmatpush1.bf16.msra.mxu0 %v640
    %716 = vmatprep.subr.bf16.mxu0 0
    %717 = vmatpush1.bf16.msra.mxu0 %v641
    %718 = vmatprep.subr.bf16.mxu0 0
    %719 = vmatpush1.bf16.msra.mxu0 %v642
    %720 = vmatprep.subr.bf16.mxu0 0
    %721 = vmatpush1.bf16.msra.mxu0 %v643
    %722 = vmatprep.subr.bf16.mxu0 0
    %723 = vmatpush1.bf16.msra.mxu0 %v644
    %724 = vmatprep.subr.bf16.mxu0 0
    %725 = vmatpush1.bf16.msra.mxu0 %v645
    %726 = vmatprep.subr.bf16.mxu0 0
    %727 = vmatpush1.bf16.msra.mxu0 0
    %728 = vmatprep.subr.bf16.mxu0 0
    %729 = vmatpush1.bf16.msra.mxu0 0
    %730 = vmatprep.subr.bf16.mxu0 0
    %731 = vmatpush1.bf16.msra.mxu0 0
    %732 = vmatprep.subr.bf16.mxu0 0
    %733 = vmatpush1.bf16.msra.mxu0 0
    %734 = vmatprep.subr.bf16.mxu0 0
    %735 = vmatpush1.bf16.msra.mxu0 0
    %736 = vmatprep.subr.bf16.mxu0 0
    %737 = vmatpush1.bf16.msra.mxu0 0
    %738 = vmatprep.subr.bf16.mxu0 0
    %739 = vmatpush1.bf16.msra.mxu0 0
    %740 = vmatprep.subr.bf16.mxu0 0
    %741 = vmatpush1.bf16.msra.mxu0 0
    %742 = vmatprep.mubr.bf16.mxu0 0
    %743 = vmatmul.mubr.bf16.gmra.mrb[0].mxu0 %v470
    %v744 = vpop.f32.mrb[0].mxu0
    %v745 = vadd.f32 %v705, %v744
    %v746 = vpop.f32.mrb[0].mxu0
    %v747 = vpop.f32.mrb[0].mxu0
    %v748 = vpop.f32.mrb[0].mxu0
    %749 = vdwg.mxu0
    %s750 = sld [smem:[#allocation4]]
    %v751 = vstv %s750
    %v752 = vmul.f32 %v745, %v751
    %vm753 = vcmask 818176
    %754 = vst.msk [vmem:[#allocation5] sm:$0xff] %vm753, %v752
    // Predicated region
    $region30: #{_forward.1} parent=1 // pred_check
      _
    $region31: #{_forward.1} parent=1 // pred_check_branch
      %756 = sbr.rel (0) target = $region33
    $region32: #{_forward.1} parent=1 // pred_region
      %s758 = ssub.s32 128, 128
      %759 = vsyncadd [#allocation6], %s758
      %s761 = sshll.u32 [#allocation5], 4
      %s762 = int_to_ptr.vmem [resolvable:$true] %s761
      %764 = dma.vmem_to_hbm [thread:$0]  %s762, 128, %s7, [#allocation6]
    $region33: #{_forward.1} parent=1 // pred_fallthru
      _
    // Predicated region
    $region34: #{_forward.1} parent=1 // pred_check
      _
    $region35: #{_forward.1} parent=1 // pred_check_branch
      %766 = sbr.rel (0) target = $region37
    $region36: #{_forward.1} parent=1 // pred_region
      %767 = dma.done [#allocation6], 128
    $region37: #{_forward.1} parent=1 // pred_fallthru
      _
    %768 = vsyncpa [#allocation6], 1

</llo_original>
